<compile_context>
chip_gen: v5e
topology: v5e:2x2
jax: 0.10.0
libtpu: 0.0.40
codegen_flags: <defaults>
</compile_context>

<pallas_src>
import jax
import jax.numpy as jnp
from jax.experimental import pallas as pl
from jax.experimental.pallas import tpu as pltpu


def _hardshrink_kernel(x_ref, o_ref, *, lambd):
    x = x_ref[...]
    # abs + single compare (EUP/VPU cheap); scalar 0 avoids materializing zeros.
    o_ref[...] = jnp.where(jnp.abs(x) >= lambd, x, 0)


_LANE_CANDIDATES = (2048, 1024, 512, 256, 128)
_TARGET_BLOCK_BYTES = 2 * 1024 * 1024  # ~2 MiB/block; ~8 MiB VMEM with in+out double-buffering


def hardshrink(x: jnp.ndarray, lambd: float = 0.5) -> jnp.ndarray:
    """HardShrink forward. Works on arbitrary-shaped inputs."""
    orig_shape = x.shape
    orig_dtype = x.dtype
    n = x.size
    if n == 0:
        return x

    # Pick the widest lane dim that divides the flat size exactly so no
    # padding / final-slice copies are needed (common for NN shapes).
    lanes = None
    for cand in _LANE_CANDIDATES:
        if n % cand == 0:
            lanes = cand
            break

    x_flat = jnp.ravel(x)
    if lanes is None:
        # Rare unaligned fallback: pad only to a multiple of `lanes`
        # (not block_rows * lanes); the edge row-block is masked by Pallas.
        lanes = 512
        n_pad = pl.cdiv(n, lanes) * lanes
        x_flat = jnp.pad(x_flat, (0, n_pad - n))
    else:
        n_pad = n

    rows = n_pad // lanes
    x2d = x_flat.reshape(rows, lanes)

    itemsize = jnp.dtype(orig_dtype).itemsize
    block_rows = (_TARGET_BLOCK_BYTES // (lanes * itemsize)) // 8 * 8
    block_rows = max(8, block_rows)
    if block_rows >= rows:
        block_rows = rows  # single full-extent block along the sublane dim

    grid = (pl.cdiv(rows, block_rows),)

    out2d = pl.pallas_call(
        lambda x_ref, o_ref: _hardshrink_kernel(x_ref, o_ref, lambd=lambd),
        out_shape=jax.ShapeDtypeStruct((rows, lanes), orig_dtype),
        grid_spec=pltpu.PrefetchScalarGridSpec(
            num_scalar_prefetch=0,
            grid=grid,
            in_specs=[pl.BlockSpec((block_rows, lanes), lambda i: (i, 0))],
            out_specs=pl.BlockSpec((block_rows, lanes), lambda i: (i, 0)),
        ),
        compiler_params=pltpu.CompilerParams(
            dimension_semantics=("parallel",),
        ),
    )(x2d)

    if n_pad != n:
        return out2d.reshape(-1)[:n].reshape(orig_shape)
    return out2d.reshape(orig_shape)


if __name__ == "__main__":
    key = jax.random.PRNGKey(0)
    # Small NCHW-like input (elementwise, so layout is irrelevant to semantics).
    x = jax.random.normal(key, (2, 4, 16, 16), dtype=jnp.float32)

    lambd = 0.5
    out = jax.block_until_ready(hardshrink(x, lambd))

    # Reference matching the PyTorch module: zero iff -lambd < x < lambd.
    ref = jnp.where((x > -lambd) & (x < lambd), 0.0, x)
    assert out.shape == x.shape and out.dtype == x.dtype
    assert jnp.allclose(out, ref), "mismatch vs reference"

    print("KERNEL_OK")
</pallas_src>

<mosaic_0001>
module attributes {stable_mosaic.version = 11 : i64} {
  func.func @_lambda_(%arg0: i32, %arg1: memref<1x2048xf32, #tpu.memory_space<vmem>>, %arg2: memref<1x2048xf32, #tpu.memory_space<vmem>>) attributes {dimension_semantics = [#tpu.dimension_semantics<parallel>], iteration_bounds = array<i64: 1>, scalar_prefetch = 0 : i64, scratch_operands = 0 : i64, tpu.core_type = #tpu.core_type<tc>, window_params = [{transform_indices = @transform_0, window_bounds = array<i64: 1, 2048>}, {transform_indices = @transform_1, window_bounds = array<i64: 1, 2048>}]} {
    %c0 = arith.constant 0 : index
    %c0_0 = arith.constant 0 : index
    %0 = vector.load %arg1[%c0, %c0_0] : memref<1x2048xf32, #tpu.memory_space<vmem>>, vector<1x2048xf32>
    %1 = math.absf %0 : vector<1x2048xf32>
    %cst = arith.constant 5.000000e-01 : f32
    %2 = vector.broadcast %cst : f32 to vector<1x2048xf32>
    %3 = arith.cmpf oge, %1, %2 : vector<1x2048xf32>
    %c0_i32 = arith.constant 0 : i32
    %4 = arith.sitofp %c0_i32 : i32 to f32
    %5 = vector.broadcast %4 : f32 to vector<1x2048xf32>
    %6 = arith.select %3, %0, %5 : vector<1x2048xi1>, vector<1x2048xf32>
    %c0_1 = arith.constant 0 : index
    %c0_2 = arith.constant 0 : index
    %7 = vector.load %arg2[%c0_1, %c0_2] : memref<1x2048xf32, #tpu.memory_space<vmem>>, vector<1x2048xf32>
    tpu.vector_store %arg2[%c0_1, %c0_2], %6 {strides = array<i32>} : memref<1x2048xf32, #tpu.memory_space<vmem>>, vector<1x2048xf32>,
    return
  }
  func.func @transform_0(%arg0: i32) -> (i32, i32) {
    %c0_i32 = arith.constant 0 : i32
    %c0_i32_0 = arith.constant 0 : i32
    return %arg0, %c0_i32 : i32, i32
  }
  func.func @transform_1(%arg0: i32) -> (i32, i32) {
    %c0_i32 = arith.constant 0 : i32
    %c0_i32_0 = arith.constant 0 : i32
    return %arg0, %c0_i32 : i32, i32
  }
}

</mosaic_0001>

<llo_original>
// kernel: tpu_custom_call.1
$region0: #{tpu_custom_call.1}
  #allocation0 [shape = 'u32[]', space=smem, size = 0x4, offset = 0x4, fixed_abs, tag = 'smem constant byte address 0x4 - core index']
  #allocation1 [shape = 'u32[72,128]{1,0:T(1,128)}', space=vmem, size = 0x9000, scoped, tag = 'internal scratch']
  %s0 = inlined_call_operand.hbm [shape: f32[1,2048], index: 0, kind: input, shape index: {}]
  %s1 = inlined_call_operand.hbm [shape: f32[1,2048], index: 1, kind: output, shape index: {}]
  %s2 = sld [smem:[#allocation0]]
  $region18: #{tpu_custom_call.1} parent=0
    _
  %s4 = ssub.s32 1, %s2
  %s5 = scalar_select 0, %s4, %s2
  $region1: #{tpu_custom_call.1} parent=0
    #allocation2 [shape = 'u8[8192]{0}', space=vmem, size = 0x2000, scoped, tag = 'input window, operand 0, single buffered']
    #allocation3 [shape = 's32[1]{0}', space=sflag, size = 0x4, scoped, tag = 'scoped memory for tpu_custom_call.1']
    #allocation4 [shape = 's32[1]{0}', space=sflag, size = 0x4, scoped, tag = 'scoped memory for tpu_custom_call.1']
    #allocation5 [shape = 'u8[8192]{0}', space=vmem, size = 0x2000, scoped, tag = 'output window, operand 0, single buffered']
    %6 = vsyncpa [#allocation3], 0
    %7 = vsyncpa [#allocation4], 0
    // Predicated region
    $region2: #{tpu_custom_call.1} parent=1 // pred_check
      _
    $region3: #{tpu_custom_call.1} parent=1 // pred_check_branch
      %9 = sbr.rel (0) target = $region5
    $region4: #{tpu_custom_call.1} parent=1 // pred_region
      %11 = vsyncadd [#allocation3], 0
      %s13 = sshll.u32 %s0, 4
      %s14 = int_to_ptr.hbm [resolvable:$true] %s13
      %s15 = sshll.u32 [#allocation2], 4
      %s16 = int_to_ptr.vmem [resolvable:$true] %s15
      %18 = dma.hbm_to_vmem [thread:$0]  %s14, 256, %s16, [#allocation3]
    $region5: #{tpu_custom_call.1} parent=1 // pred_fallthru
      _
    // Predicated region
    $region6: #{tpu_custom_call.1} parent=1 // pred_check
      _
    $region7: #{tpu_custom_call.1} parent=1 // pred_check_branch
      %20 = sbr.rel (0) target = $region9
    $region8: #{tpu_custom_call.1} parent=1 // pred_region
      %22 = dma.done [#allocation3], 256
    $region9: #{tpu_custom_call.1} parent=1 // pred_fallthru
      _
    %v23 = vld [vmem:[#allocation2] sm:$0xff]
    %v24 = vld [vmem:[#allocation2 + $0x8] sm:$0xff]
    %v25 = vand.u32 2147483647, %v23
    %v26 = vand.u32 2147483647, %v24
    %vm27 = vcmp.ge.f32.partialorder %v25, 0.5
    %vm28 = vcmp.ge.f32.partialorder %v26, 0.5
    %v29 = vsel %vm27, %v23, 0.0
    %v30 = vsel %vm28, %v24, 0.0
    %31 = vst [vmem:[#allocation5] sm:$0xff] %v29
    %32 = vst [vmem:[#allocation5 + $0x8] sm:$0xff] %v30
    // Predicated region
    $region10: #{tpu_custom_call.1} parent=1 // pred_check
      _
    $region11: #{tpu_custom_call.1} parent=1 // pred_check_branch
      %34 = sbr.rel (0) target = $region13
    $region12: #{tpu_custom_call.1} parent=1 // pred_region
      %36 = vsyncadd [#allocation4], 0
      %s38 = sshll.u32 [#allocation5], 4
      %s39 = int_to_ptr.vmem [resolvable:$true] %s38
      %s40 = sshll.u32 %s1, 4
      %s41 = int_to_ptr.hbm [resolvable:$true] %s40
      %43 = dma.vmem_to_hbm [thread:$0]  %s39, 256, %s41, [#allocation4]
    $region13: #{tpu_custom_call.1} parent=1 // pred_fallthru
      _
    // Predicated region
    $region14: #{tpu_custom_call.1} parent=1 // pred_check
      _
    $region15: #{tpu_custom_call.1} parent=1 // pred_check_branch
      %45 = sbr.rel (0) target = $region17
    $region16: #{tpu_custom_call.1} parent=1 // pred_region
      %47 = dma.done [#allocation4], 256
    $region17: #{tpu_custom_call.1} parent=1 // pred_fallthru
      _
    %48 = vsyncpa [#allocation3], 1
    %49 = vsyncpa [#allocation4], 1

</llo_original>
